<compile_context>
chip_gen: v7x
topology: tpu7x:2x2x1
jax: 0.10.0
libtpu: 0.0.40
codegen_flags: <defaults>
</compile_context>

<pallas_src>
import jax
import jax.numpy as jnp
from jax.experimental import pallas as pl
from jax.experimental.pallas import tpu as pltpu


def _concat_rows_kernel(xyz_ref, feat_ref, out_ref):
    # xyz_ref: (TM, 3)   feat_ref: (TM, C)   out_ref: (TM, 3 + C)
    # Two direct slab stores; no concatenated temporary (avoids the extra
    # vreg pressure / lane-shift+select a concat at offset 3 would emit).
    out_ref[:, 0:3] = xyz_ref[...].astype(out_ref.dtype)
    out_ref[:, 3:] = feat_ref[...].astype(out_ref.dtype)


def _padded_row_bytes(c, itemsize):
    """Per-row VMEM footprint of the (row,3)+(row,C)+(row,3+C) blocks after
    (8,128) lane padding."""
    def lanes(d):
        return ((d + 127) // 128) * 128
    return (lanes(3) + lanes(c) + lanes(3 + c)) * itemsize


def _pick_tile_rows(m, padded_row_bytes, target_block_bytes=6 << 20,
                    max_rows=4096):
    """Row-tile size: multiple of 8 (or the full extent), sized so the
    double-buffered working set stays well inside a 32 MiB scoped VMEM limit,
    preferring an exact divisor of m so no ragged tail block is needed."""
    if m <= 8:
        return m
    tm = min(m, max_rows, max(8, target_block_bytes // max(padded_row_bytes, 1)))
    tm = max(8, (tm // 8) * 8)
    if tm >= m:
        return m
    t = tm
    while t > 8 and m % t != 0:
        t -= 8
    if m % t == 0:
        return t
    return tm  # ragged tail: Pallas masks out-of-bounds rows of the last block


def all_point_grouping_forward(xyz, new_xyz, features=None, use_xyz=True):
    """JAX/Pallas equivalent of AllPointGrouping.forward.

    xyz:      (B, N, 3)
    new_xyz:  unused (kept for signature parity with the PyTorch module)
    features: (B, N, C) or None
    returns:  (new_features,) with new_features of shape (B, 1, N, 3+C)
              (or (B, 1, N, C) / (B, 1, N, 3) depending on the branches).
    """
    del new_xyz  # not used, matching the PyTorch module

    B, N, three = xyz.shape
    assert three == 3, f"xyz last dim must be 3, got {three}"

    if features is None:
        return (xyz[:, None, :, :],)
    if not use_xyz:
        return (features[:, None, :, :],)

    C = features.shape[-1]
    out_c = 3 + C
    out_dtype = jnp.result_type(xyz.dtype, features.dtype)

    # Flatten (B, N) -> M rows: free row-major reshape; one grid axis tiles
    # everything (amortizes per-step overhead, feeds both TCs on v7x even
    # when B is small).
    M = B * N
    xyz2 = xyz.reshape(M, 3)
    feat2 = features.reshape(M, C)

    tm = _pick_tile_rows(M, _padded_row_bytes(C, jnp.dtype(out_dtype).itemsize))
    grid = (pl.cdiv(M, tm),)

    out = pl.pallas_call(
        _concat_rows_kernel,
        out_shape=jax.ShapeDtypeStruct((M, out_c), out_dtype),
        grid_spec=pltpu.PrefetchScalarGridSpec(
            num_scalar_prefetch=0,
            grid=grid,
            in_specs=[
                pl.BlockSpec((tm, 3), lambda i: (i, 0)),
                pl.BlockSpec((tm, C), lambda i: (i, 0)),
            ],
            out_specs=pl.BlockSpec((tm, out_c), lambda i: (i, 0)),
        ),
        compiler_params=pltpu.CompilerParams(
            dimension_semantics=("parallel",),
            # Explicit, generation-aware limit: blocks are sized to <= ~12 MiB
            # double-buffered, so 32 MiB gives headroom on v7x (64 MiB phys)
            # and raises the v5e default scoped limit (16 MiB).
            vmem_limit_bytes=32 * 1024 * 1024,
        ),
    )(xyz2, feat2)

    # Glue: (M, 3+C) -> (B, 1, N, 3+C); row-major reshape, no data movement.
    return (out.reshape(B, 1, N, out_c),)


def build_mlp_params(mlp_cfg, in_channels, key):
    """Deterministic init of the (unused-in-forward) Linear/BN parameters,
    mirroring PointGrouping.build_mlps shapes."""
    params = []
    for out_ch in mlp_cfg:
        key, wk = jax.random.split(key)
        w = jax.random.normal(wk, (out_ch, in_channels), jnp.float32) * 0.02
        params.append(dict(
            linear_w=w,
            bn_gamma=jnp.ones((out_ch,), jnp.float32),
            bn_beta=jnp.zeros((out_ch,), jnp.float32),
            bn_running_mean=jnp.zeros((out_ch,), jnp.float32),
            bn_running_var=jnp.ones((out_ch,), jnp.float32),
        ))
        in_channels = out_ch
    return params


if __name__ == "__main__":
    key = jax.random.PRNGKey(0)
    kx, kf, kn, kp = jax.random.split(key, 4)

    B, N, C = 2, 16, 4
    xyz = jax.random.normal(kx, (B, N, 3), jnp.float32)
    features = jax.random.normal(kf, (B, N, C), jnp.float32)
    new_xyz = jax.random.normal(kn, (B, N, 3), jnp.float32)  # unused (parity)

    # grouping_cfg.mlps analogue; built in __init__ but never used in forward().
    _mlp_params = build_mlp_params([32, 32], in_channels=C + 3, key=kp)

    (new_features,) = all_point_grouping_forward(xyz, new_xyz, features,
                                                 use_xyz=True)
    new_features = jax.block_until_ready(new_features)

    # Reference check against plain JAX (same semantics as torch.cat, dim=-1).
    ref = jnp.concatenate([xyz[:, None], features[:, None]], axis=-1)
    assert new_features.shape == (B, 1, N, 3 + C), new_features.shape
    assert new_features.dtype == ref.dtype
    assert jnp.allclose(new_features, ref), "mismatch vs reference"

    print("KERNEL_OK")
</pallas_src>

<mosaic_0001>
module attributes {stable_mosaic.version = 11 : i64} {
  func.func @_concat_rows_kernel(%arg0: i32, %arg1: memref<32x3xf32, #tpu.memory_space<vmem>>, %arg2: memref<32x4xf32, #tpu.memory_space<vmem>>, %arg3: memref<32x7xf32, #tpu.memory_space<vmem>>) attributes {dimension_semantics = [#tpu.dimension_semantics<parallel>], iteration_bounds = array<i64: 1>, scalar_prefetch = 0 : i64, scratch_operands = 0 : i64, tpu.core_type = #tpu.core_type<tc>, window_params = [{transform_indices = @transform_0, window_bounds = array<i64: 32, 3>}, {transform_indices = @transform_1, window_bounds = array<i64: 32, 4>}, {transform_indices = @transform_2, window_bounds = array<i64: 32, 7>}]} {
    %c0 = arith.constant 0 : index
    %c0_0 = arith.constant 0 : index
    %0 = vector.load %arg1[%c0, %c0_0] : memref<32x3xf32, #tpu.memory_space<vmem>>, vector<32x3xf32>
    %c0_1 = arith.constant 0 : index
    %c0_2 = arith.constant 0 : index
    %1 = vector.load %arg3[%c0_1, %c0_2] : memref<32x7xf32, #tpu.memory_space<vmem>>, vector<32x3xf32>
    tpu.vector_store %arg3[%c0_1, %c0_2], %0 {strides = array<i32>} : memref<32x7xf32, #tpu.memory_space<vmem>>, vector<32x3xf32>,
    %c0_3 = arith.constant 0 : index
    %c0_4 = arith.constant 0 : index
    %2 = vector.load %arg2[%c0_3, %c0_4] : memref<32x4xf32, #tpu.memory_space<vmem>>, vector<32x4xf32>
    %c0_5 = arith.constant 0 : index
    %c3 = arith.constant 3 : index
    %3 = vector.load %arg3[%c0_5, %c3] : memref<32x7xf32, #tpu.memory_space<vmem>>, vector<32x4xf32>
    tpu.vector_store %arg3[%c0_5, %c3], %2 {strides = array<i32>} : memref<32x7xf32, #tpu.memory_space<vmem>>, vector<32x4xf32>,
    return
  }
  func.func @transform_0(%arg0: i32) -> (i32, i32) {
    %c0_i32 = arith.constant 0 : i32
    %c0_i32_0 = arith.constant 0 : i32
    return %arg0, %c0_i32 : i32, i32
  }
  func.func @transform_1(%arg0: i32) -> (i32, i32) {
    %c0_i32 = arith.constant 0 : i32
    %c0_i32_0 = arith.constant 0 : i32
    return %arg0, %c0_i32 : i32, i32
  }
  func.func @transform_2(%arg0: i32) -> (i32, i32) {
    %c0_i32 = arith.constant 0 : i32
    %c0_i32_0 = arith.constant 0 : i32
    return %arg0, %c0_i32 : i32, i32
  }
}

</mosaic_0001>

<llo_original>
// kernel: tpu_custom_call.1
$region0: #{tpu_custom_call.1}
  #allocation0 [shape = 'u32[]', space=smem, size = 0x4, offset = 0x4, fixed_abs, tag = 'smem constant byte address 0x4 - core index']
  #allocation1 [shape = 'u32[144,128]{1,0:T(1,128)}', space=vmem, size = 0x12000, scoped, tag = 'internal scratch']
  %s0 = inlined_call_operand.vmem [shape: f32[32,3], index: 0, kind: input, shape index: {}]
  %s1 = inlined_call_operand.vmem [shape: f32[32,4], index: 1, kind: input, shape index: {}]
  %s2 = inlined_call_operand.vmem [shape: f32[32,7], index: 2, kind: output, shape index: {}]
  %s3 = sld [smem:[#allocation0]]
  $region18: #{tpu_custom_call.1} parent=0
    _
  %s5 = ssub.s32 1, %s3
  %s6 = scalar_select 0, %s5, %s3
  // Predicated region
  $region2: #{tpu_custom_call.1} parent=0 // pred_check
    _
  $region3: #{tpu_custom_call.1} parent=0 // pred_check_branch
    %8 = sbr.rel (0) target = $region5
  $region4: #{tpu_custom_call.1} parent=0 // pred_region
    _
  $region5: #{tpu_custom_call.1} parent=0 // pred_fallthru
    _
  // Predicated region
  $region6: #{tpu_custom_call.1} parent=0 // pred_check
    _
  $region7: #{tpu_custom_call.1} parent=0 // pred_check_branch
    %10 = sbr.rel (0) target = $region9
  $region8: #{tpu_custom_call.1} parent=0 // pred_region
    _
  $region9: #{tpu_custom_call.1} parent=0 // pred_fallthru
    _
  %v11 = vld [vmem:[%s0] sm:$0xff]
  %v12 = vld [vmem:[%s0 + $0x8] sm:$0xff]
  %v13 = vld [vmem:[%s0 + $0x10] sm:$0xff]
  %v14 = vld [vmem:[%s0 + $0x18] sm:$0xff]
  %vm15 = vcmask 23552
  %16 = vst.msk [vmem:[%s2] sm:$0xff] %vm15, %v11
  %17 = vst.msk [vmem:[%s2 + $0x8] sm:$0xff] %vm15, %v12
  %18 = vst.msk [vmem:[%s2 + $0x10] sm:$0xff] %vm15, %v13
  %19 = vst.msk [vmem:[%s2 + $0x18] sm:$0xff] %vm15, %v14
  %v20 = vld [vmem:[%s1] sm:$0xff]
  %v21 = vld [vmem:[%s1 + $0x8] sm:$0xff]
  %v22 = vld [vmem:[%s1 + $0x10] sm:$0xff]
  %v23 = vld [vmem:[%s1 + $0x18] sm:$0xff]
  %28 = vrot.lane.b32.xlu0 %v20, 3
  %v29 = vpop.permute.xlu0 %28
  %30 = vrot.lane.b32.xlu0 %v21, 3
  %v31 = vpop.permute.xlu0 %30
  %32 = vrot.lane.b32.xlu0 %v22, 3
  %v33 = vpop.permute.xlu0 %32
  %34 = vrot.lane.b32.xlu0 %v23, 3
  %v35 = vpop.permute.xlu0 %34
  %vm40 = vcmask 56344
  %41 = vst.msk [vmem:[%s2] sm:$0xff] %vm40, %v29
  %42 = vst.msk [vmem:[%s2 + $0x8] sm:$0xff] %vm40, %v31
  %43 = vst.msk [vmem:[%s2 + $0x10] sm:$0xff] %vm40, %v33
  %44 = vst.msk [vmem:[%s2 + $0x18] sm:$0xff] %vm40, %v35
  // Predicated region
  $region10: #{tpu_custom_call.1} parent=0 // pred_check
    _
  $region11: #{tpu_custom_call.1} parent=0 // pred_check_branch
    %46 = sbr.rel (0) target = $region13
  $region12: #{tpu_custom_call.1} parent=0 // pred_region
    _
  $region13: #{tpu_custom_call.1} parent=0 // pred_fallthru
    _
  // Predicated region
  $region14: #{tpu_custom_call.1} parent=0 // pred_check
    _
  $region15: #{tpu_custom_call.1} parent=0 // pred_check_branch
    %48 = sbr.rel (0) target = $region17
  $region16: #{tpu_custom_call.1} parent=0 // pred_region
    _
  $region17: #{tpu_custom_call.1} parent=0 // pred_fallthru
    _

</llo_original>
